<compile_context>
chip_gen: v7x
topology: tpu7x:2x2x1
jax: 0.10.0
libtpu: 0.0.40
codegen_flags: <defaults>
</compile_context>

<pallas_src>
from functools import partial

import jax
import jax.numpy as jnp
from jax.experimental import pallas as pl
from jax.experimental.pallas import tpu as pltpu


def _patch_embed_kernel(x_ref, w_ref, b_ref, o_ref):
    # x_ref: (C, TH, P)   w_ref: (C, P, E_pad)   b_ref: (1, E_pad)
    # o_ref: (TH, E_pad)
    C = x_ref.shape[0]
    acc = jnp.dot(x_ref[0], w_ref[0], preferred_element_type=jnp.float32)
    for c in range(1, C):  # C is a small static int -> unrolled MXU calls
        acc = acc + jnp.dot(x_ref[c], w_ref[c],
                            preferred_element_type=jnp.float32)
    o_ref[...] = (acc + b_ref[...]).astype(o_ref.dtype)


def _round_up(n, m):
    return ((n + m - 1) // m) * m


def prepare_patch_embed_params(weight, bias, *, in_chans, patch_size):
    """One-time parameter prep (do at module init, NOT per forward call).

    weight: (E, C*P) in PyTorch nn.Linear layout; bias: (E,).
    Returns (w3, b2d): weight transposed/reshaped to (C, P, E_pad) and bias
    (1, E_pad), with E zero-padded up to a multiple of 128 so the kernel's
    output stores are lane-dense.
    """
    E, K = weight.shape
    assert K == in_chans * patch_size, "weight in_features must equal C*P"
    e_pad = _round_up(E, 128)
    w3 = weight.T.reshape(in_chans, patch_size, E)  # row k = c*P + p  ('(c p1)')
    if e_pad != E:
        w3 = jnp.pad(w3, ((0, 0), (0, 0), (0, e_pad - E)))
        bias = jnp.pad(bias, (0, e_pad - E))
    b2d = bias.reshape(1, e_pad)
    return w3, b2d


def _pick_row_tile(H, C, P, e_pad, itemsize, budget_bytes=40 * 1024 * 1024):
    """Largest row tile (multiple of 8, <= 256) whose pipelined VMEM
    footprint fits the budget (sized conservatively for v7x's 64 MiB)."""
    lanes = lambda n: _round_up(n, 128)
    subl = lambda n: _round_up(n, 8)

    def footprint(th):
        x_b = 2 * C * subl(th) * lanes(P) * itemsize       # double-buffered in
        w_b = 1 * C * subl(P) * lanes(e_pad) * itemsize    # single-buffered
        bias_b = 8 * lanes(e_pad) * itemsize               # single-buffered
        o_b = 2 * subl(th) * lanes(e_pad) * itemsize       # double-buffered out
        return x_b + w_b + bias_b + o_b

    th = H if H <= 256 else 256
    if th != H:
        th = max(8, (th // 8) * 8)
    while th > 8 and footprint(th) > budget_bytes:
        th = max(8, th // 2)
    return th, footprint(th)


@partial(jax.jit, static_argnames=("embed_dim",))
def patch_embed_1d(x, w3, b2d, *, embed_dim):
    """x: (B, C, L); w3: (C, P, E_pad); b2d: (1, E_pad). Returns (B, H, E)."""
    B, C, L = x.shape
    Cw, P, e_pad = w3.shape
    assert C == Cw, "channel mismatch between x and prepared weight"
    H = L // P
    assert H * P == L, "signal length must be a multiple of patch_size"

    x4 = x.reshape(B, C, H, P)  # free reshape; no data movement
    itemsize = jnp.dtype(x.dtype).itemsize
    th, fp = _pick_row_tile(H, C, P, e_pad, itemsize)
    grid = (B, pl.cdiv(H, th))

    cost = pl.CostEstimate(
        flops=int(2 * B * H * C * P * e_pad),
        transcendentals=0,
        bytes_accessed=int(itemsize * (B * C * H * P + C * P * e_pad
                                       + e_pad + B * H * e_pad)),
    )

    out_pad = pl.pallas_call(
        _patch_embed_kernel,
        out_shape=jax.ShapeDtypeStruct((B, H, e_pad), x.dtype),
        grid=grid,
        in_specs=[
            # activation: one (C, TH, P) slab per (batch, row-tile) grid step
            pl.BlockSpec((None, C, th, P), lambda b, h: (b, 0, h, 0)),
            # weight / bias: grid-invariant residents -> single-buffered
            pl.BlockSpec((C, P, e_pad), lambda b, h: (0, 0, 0),
                         pipeline_mode=pl.Buffered(1)),
            pl.BlockSpec((1, e_pad), lambda b, h: (0, 0),
                         pipeline_mode=pl.Buffered(1)),
        ],
        out_specs=pl.BlockSpec((None, th, e_pad), lambda b, h: (b, h, 0)),
        compiler_params=pltpu.CompilerParams(
            dimension_semantics=("parallel", "parallel"),
            vmem_limit_bytes=int(min(64 * 1024 * 1024,
                                     max(32 * 1024 * 1024, 2 * fp))),
        ),
        cost_estimate=cost,
    )(x4, w3, b2d)

    if e_pad != embed_dim:
        out_pad = out_pad[..., :embed_dim]
    return out_pad  # norm_layer=None -> Identity, nothing to do


if __name__ == "__main__":
    # Small, module-consistent shapes:
    #   signal_length=128, patch_size=16 -> num_patches H=8
    #   in_chans C=4, embed_dim E=32, batch B=2
    B, C, L = 2, 4, 128
    P, E = 16, 32
    K = C * P

    key = jax.random.PRNGKey(0)
    kx, kw, kb = jax.random.split(key, 3)
    x = jax.random.normal(kx, (B, C, L), dtype=jnp.float32)
    # Deterministic synthetic parameters (PyTorch Linear layout: (E, K)).
    weight = (jax.random.normal(kw, (E, K), dtype=jnp.float32)
              * (1.0 / jnp.sqrt(K)))
    bias = jax.random.normal(kb, (E,), dtype=jnp.float32) * 0.02

    # One-time parameter prep (equivalent to doing it at module init).
    w3, b2d = prepare_patch_embed_params(weight, bias, in_chans=C,
                                         patch_size=P)

    out = patch_embed_1d(x, w3, b2d, embed_dim=E)
    out = jax.block_until_ready(out)

    # Plain-JAX reference: rearrange 'b c (h p1) -> b h (c p1)' + Linear.
    H = L // P
    x_re = x.reshape(B, C, H, P).transpose(0, 2, 1, 3).reshape(B, H, K)
    ref = x_re @ weight.T + bias
    assert out.shape == (B, H, E)
    assert jnp.allclose(out, ref, atol=1e-4, rtol=1e-4)

    print("KERNEL_OK")
</pallas_src>

<mosaic_0001>
module attributes {stable_mosaic.version = 11 : i64} {
  func.func @_patch_embed_kernel(%arg0: i32, %arg1: i32, %arg2: memref<1x4x8x16xf32, #tpu.memory_space<vmem>>, %arg3: memref<4x16x128xf32, #tpu.memory_space<vmem>>, %arg4: memref<1x128xf32, #tpu.memory_space<vmem>>, %arg5: memref<1x8x128xf32, #tpu.memory_space<vmem>>) attributes {dimension_semantics = [#tpu.dimension_semantics<parallel>, #tpu.dimension_semantics<parallel>], iteration_bounds = array<i64: 2, 1>, scalar_prefetch = 0 : i64, scratch_operands = 0 : i64, tpu.core_type = #tpu.core_type<tc>, window_params = [{transform_indices = @transform_0, window_bounds = array<i64: 1, 4, 8, 16>}, {pipeline_mode = #tpu.pipeline_mode<synchronous>, transform_indices = @transform_1, window_bounds = array<i64: 4, 16, 128>}, {pipeline_mode = #tpu.pipeline_mode<synchronous>, transform_indices = @transform_2, window_bounds = array<i64: 1, 128>}, {transform_indices = @transform_3, window_bounds = array<i64: 1, 8, 128>}]} {
    %c0 = arith.constant 0 : index
    %c0_0 = arith.constant 0 : index
    %c0_1 = arith.constant 0 : index
    %c0_2 = arith.constant 0 : index
    %0 = vector.load %arg2[%c0, %c0_0, %c0_1, %c0_2] : memref<1x4x8x16xf32, #tpu.memory_space<vmem>>, vector<1x1x8x16xf32>
    %1 = vector.shape_cast %0 : vector<1x1x8x16xf32> to vector<8x16xf32>
    %c0_3 = arith.constant 0 : index
    %c0_4 = arith.constant 0 : index
    %c0_5 = arith.constant 0 : index
    %2 = vector.load %arg3[%c0_3, %c0_4, %c0_5] : memref<4x16x128xf32, #tpu.memory_space<vmem>>, vector<1x16x128xf32>
    %3 = vector.shape_cast %2 : vector<1x16x128xf32> to vector<16x128xf32>
    %cst = arith.constant dense<0.000000e+00> : vector<8x128xf32>
    %4 = tpu.matmul %1, %3, %cst {dimension_numbers = #tpu.dot_dimension_numbers<[1], [0], [0], [1], [0, 0, 1, 1], [], []>} : vector<8x16xf32>, vector<16x128xf32>, vector<8x128xf32> -> vector<8x128xf32>
    %c0_6 = arith.constant 0 : index
    %c1 = arith.constant 1 : index
    %c0_7 = arith.constant 0 : index
    %c0_8 = arith.constant 0 : index
    %5 = vector.load %arg2[%c0_6, %c1, %c0_7, %c0_8] : memref<1x4x8x16xf32, #tpu.memory_space<vmem>>, vector<1x1x8x16xf32>
    %6 = vector.shape_cast %5 : vector<1x1x8x16xf32> to vector<8x16xf32>
    %c1_9 = arith.constant 1 : index
    %c0_10 = arith.constant 0 : index
    %c0_11 = arith.constant 0 : index
    %7 = vector.load %arg3[%c1_9, %c0_10, %c0_11] : memref<4x16x128xf32, #tpu.memory_space<vmem>>, vector<1x16x128xf32>
    %8 = vector.shape_cast %7 : vector<1x16x128xf32> to vector<16x128xf32>
    %cst_12 = arith.constant dense<0.000000e+00> : vector<8x128xf32>
    %9 = tpu.matmul %6, %8, %cst_12 {dimension_numbers = #tpu.dot_dimension_numbers<[1], [0], [0], [1], [0, 0, 1, 1], [], []>} : vector<8x16xf32>, vector<16x128xf32>, vector<8x128xf32> -> vector<8x128xf32>
    %10 = arith.addf %4, %9 : vector<8x128xf32>
    %c0_13 = arith.constant 0 : index
    %c2 = arith.constant 2 : index
    %c0_14 = arith.constant 0 : index
    %c0_15 = arith.constant 0 : index
    %11 = vector.load %arg2[%c0_13, %c2, %c0_14, %c0_15] : memref<1x4x8x16xf32, #tpu.memory_space<vmem>>, vector<1x1x8x16xf32>
    %12 = vector.shape_cast %11 : vector<1x1x8x16xf32> to vector<8x16xf32>
    %c2_16 = arith.constant 2 : index
    %c0_17 = arith.constant 0 : index
    %c0_18 = arith.constant 0 : index
    %13 = vector.load %arg3[%c2_16, %c0_17, %c0_18] : memref<4x16x128xf32, #tpu.memory_space<vmem>>, vector<1x16x128xf32>
    %14 = vector.shape_cast %13 : vector<1x16x128xf32> to vector<16x128xf32>
    %cst_19 = arith.constant dense<0.000000e+00> : vector<8x128xf32>
    %15 = tpu.matmul %12, %14, %cst_19 {dimension_numbers = #tpu.dot_dimension_numbers<[1], [0], [0], [1], [0, 0, 1, 1], [], []>} : vector<8x16xf32>, vector<16x128xf32>, vector<8x128xf32> -> vector<8x128xf32>
    %16 = arith.addf %10, %15 : vector<8x128xf32>
    %c0_20 = arith.constant 0 : index
    %c3 = arith.constant 3 : index
    %c0_21 = arith.constant 0 : index
    %c0_22 = arith.constant 0 : index
    %17 = vector.load %arg2[%c0_20, %c3, %c0_21, %c0_22] : memref<1x4x8x16xf32, #tpu.memory_space<vmem>>, vector<1x1x8x16xf32>
    %18 = vector.shape_cast %17 : vector<1x1x8x16xf32> to vector<8x16xf32>
    %c3_23 = arith.constant 3 : index
    %c0_24 = arith.constant 0 : index
    %c0_25 = arith.constant 0 : index
    %19 = vector.load %arg3[%c3_23, %c0_24, %c0_25] : memref<4x16x128xf32, #tpu.memory_space<vmem>>, vector<1x16x128xf32>
    %20 = vector.shape_cast %19 : vector<1x16x128xf32> to vector<16x128xf32>
    %cst_26 = arith.constant dense<0.000000e+00> : vector<8x128xf32>
    %21 = tpu.matmul %18, %20, %cst_26 {dimension_numbers = #tpu.dot_dimension_numbers<[1], [0], [0], [1], [0, 0, 1, 1], [], []>} : vector<8x16xf32>, vector<16x128xf32>, vector<8x128xf32> -> vector<8x128xf32>
    %22 = arith.addf %16, %21 : vector<8x128xf32>
    %c0_27 = arith.constant 0 : index
    %c0_28 = arith.constant 0 : index
    %23 = vector.load %arg4[%c0_27, %c0_28] : memref<1x128xf32, #tpu.memory_space<vmem>>, vector<1x128xf32>
    %24 = vector.broadcast %23 : vector<1x128xf32> to vector<8x128xf32>
    %25 = arith.addf %22, %24 : vector<8x128xf32>
    %c0_29 = arith.constant 0 : index
    %c0_30 = arith.constant 0 : index
    %c0_31 = arith.constant 0 : index
    %26 = vector.load %arg5[%c0_29, %c0_30, %c0_31] : memref<1x8x128xf32, #tpu.memory_space<vmem>>, vector<1x8x128xf32>
    %27 = vector.shape_cast %26 : vector<1x8x128xf32> to vector<8x128xf32>
    %28 = vector.shape_cast %25 : vector<8x128xf32> to vector<1x8x128xf32>
    tpu.vector_store %arg5[%c0_29, %c0_30, %c0_31], %28 {strides = array<i32>} : memref<1x8x128xf32, #tpu.memory_space<vmem>>, vector<1x8x128xf32>,
    return
  }
  func.func @transform_0(%arg0: i32, %arg1: i32) -> (i32, i32, i32, i32) {
    %c0_i32 = arith.constant 0 : i32
    %c0_i32_0 = arith.constant 0 : i32
    %c0_i32_1 = arith.constant 0 : i32
    return %arg0, %c0_i32, %arg1, %c0_i32_0 : i32, i32, i32, i32
  }
  func.func @transform_1(%arg0: i32, %arg1: i32) -> (i32, i32, i32) {
    %c0_i32 = arith.constant 0 : i32
    %c0_i32_0 = arith.constant 0 : i32
    %c0_i32_1 = arith.constant 0 : i32
    %c0_i32_2 = arith.constant 0 : i32
    return %c0_i32, %c0_i32_0, %c0_i32_1 : i32, i32, i32
  }
  func.func @transform_2(%arg0: i32, %arg1: i32) -> (i32, i32) {
    %c0_i32 = arith.constant 0 : i32
    %c0_i32_0 = arith.constant 0 : i32
    %c0_i32_1 = arith.constant 0 : i32
    return %c0_i32, %c0_i32_0 : i32, i32
  }
  func.func @transform_3(%arg0: i32, %arg1: i32) -> (i32, i32, i32) {
    %c0_i32 = arith.constant 0 : i32
    %c0_i32_0 = arith.constant 0 : i32
    return %arg0, %arg1, %c0_i32 : i32, i32, i32
  }
}

</mosaic_0001>

<llo_original>
// kernel: patch_embed_1d.1
$region0: #{patch_embed_1d.1}
  #allocation0 [shape = 'u32[]', space=smem, size = 0x4, offset = 0x4, fixed_abs, tag = 'smem constant byte address 0x4 - core index']
  #allocation1 [shape = 'u32[144,128]{1,0:T(1,128)}', space=vmem, size = 0x12000, scoped, tag = 'internal scratch']
  %s0 = inlined_call_operand.vmem [shape: f32[2,4,8,16], index: 0, kind: input, shape index: {}]
  %s1 = inlined_call_operand.vmem [shape: f32[4,16,128], index: 1, kind: input, shape index: {}]
  %s2 = inlined_call_operand.vmem [shape: f32[1,128], index: 2, kind: input, shape index: {}]
  %s3 = inlined_call_operand.hbm [shape: f32[2,8,128], index: 3, kind: output, shape index: {}]
  %s4 = sld [smem:[#allocation0]]
  $region45: #{patch_embed_1d.1} parent=0
    _
  %s6 = ssub.s32 1, %s4
  %s7 = scalar_select 0, %s6, %s4
  $region1: #{patch_embed_1d.1} parent=0
    #allocation2 [shape = 'u8[8192]{0}', space=vmem, size = 0x2000, scoped, tag = 'output window, operand 0']
    #allocation3 [shape = 's32[2]{0}', space=sflag, size = 0x8, scoped, tag = 'scoped memory for patch_embed_1d.1']
    %8 = vsyncpa [#allocation3], 0
    %s9 = scalar_lea.sflag [#allocation3], 1
    %10 = vsyncpa %s9, 0
    loop: start=0, step=1, limit=4
    $region2: #{patch_embed_1d.1} parent=1 // loop_pre_header
      _
    $region3: #{patch_embed_1d.1} parent=1 // loop_header
      %s12 = sphi 0, %s16
      %p13 = scmp.ge.s32.totalorder %s12, 4
      %s19 = sphi 0, %s31
      %s20 = sphi 0, %s27
      %s21 = sphi 0, %s19
      %s22 = sphi 0, %s20
      %s23 = sphi 0, %s21
      %s24 = sphi 0, %s22
      %s36 = sphi 0, %s38
      %s39 = sphi 0, %s36
      %s40 = sphi 0, %s39
      %s56 = sphi 0, %s40
      %s60 = sphi 0, %s60
      %s62 = sphi 0, %s60
      %s63 = sphi 0, %s62
      %s77 = sphi 0, %s63
      %s81 = sphi 0, %s81
      %s83 = sphi 0, %s81
      %s84 = sphi 0, %s83
      %s98 = sphi 0, %s84
      %s106 = sphi 0, %s108
      %s109 = sphi 0, %s106
      %s110 = sphi 0, %s109
      %s126 = sphi 0, %s110
    $region4: #{patch_embed_1d.1} parent=1 // loop_header_branch
      %15 = sbr.rel (%p13) target = $region8
    $region5: #{patch_embed_1d.1} parent=1 // loop_body
      %s17 = ssub.s32 %s12, 1
      %s18 = ssub.s32 %s12, 2
      %s25 = sadd.s32 1, %s20
      %p26 = scmp.ge.s32.totalorder %s25, 1
      %s27 = scalar_select %p26, 0, %s25
      %s28 = sadd.s32 1, %s19
      %s29 = scalar_select %p26, %s28, %s19
      %p30 = scmp.ge.s32.totalorder %s29, 2
      %s31 = scalar_select %p30, 0, %s29
      %s32 = ssub.s32 %s19, %s31
      %s33 = ssub.s32 %s20, %s27
      %s34 = sor.u32 %s32, %s33
      %p35 = scmp.eq.s32.totalorder %s34, 0
      %s37 = sadd.s32 %s36, 1
      %s38 = scalar_select %p35, %s36, %s37
      %p41 = pneg %p35
      %p42 = scmp.eq.s32.totalorder %s12, 1
      %p43 = por %p41, %p42
      %p44 = scmp.ne.s32.totalorder %s36, %s39
      %p45 = scmp.eq.s32.totalorder %s12, 0
      %p46 = por %p44, %p45
      %p47 = scmp.ne.s32.totalorder %s36, %s39
      %p48 = scmp.eq.s32.totalorder %s17, 1
      %p49 = por %p47, %p48
      %p50 = scmp.ne.s32.totalorder %s39, %s40
      %p51 = scmp.eq.s32.totalorder %s17, 0
      %p52 = por %p50, %p51
      %p53 = scmp.ne.s32.totalorder %s39, %s40
      %p54 = scmp.eq.s32.totalorder %s18, 1
      %p55 = por %p53, %p54
      %p57 = scmp.ne.s32.totalorder %s40, %s56
      %p58 = scmp.eq.s32.totalorder %s18, 0
      %p59 = por %p57, %p58
      %s61 = sadd.s32 %s60, 1
      %p64 = scmp.eq.s32.totalorder %s12, 1
      %p65 = scmp.ne.s32.totalorder %s60, %s62
      %p66 = scmp.eq.s32.totalorder %s12, 0
      %p67 = por %p65, %p66
      %p68 = scmp.ne.s32.totalorder %s60, %s62
      %p69 = scmp.eq.s32.totalorder %s17, 1
      %p70 = por %p68, %p69
      %p71 = scmp.ne.s32.totalorder %s62, %s63
      %p72 = scmp.eq.s32.totalorder %s17, 0
      %p73 = por %p71, %p72
      %p74 = scmp.ne.s32.totalorder %s62, %s63
      %p75 = scmp.eq.s32.totalorder %s18, 1
      %p76 = por %p74, %p75
      %p78 = scmp.ne.s32.totalorder %s63, %s77
      %p79 = scmp.eq.s32.totalorder %s18, 0
      %p80 = por %p78, %p79
      %s82 = sadd.s32 %s81, 1
      %p85 = scmp.eq.s32.totalorder %s12, 1
      %p86 = scmp.ne.s32.totalorder %s81, %s83
      %p87 = scmp.eq.s32.totalorder %s12, 0
      %p88 = por %p86, %p87
      %p89 = scmp.ne.s32.totalorder %s81, %s83
      %p90 = scmp.eq.s32.totalorder %s17, 1
      %p91 = por %p89, %p90
      %p92 = scmp.ne.s32.totalorder %s83, %s84
      %p93 = scmp.eq.s32.totalorder %s17, 0
      %p94 = por %p92, %p93
      %p95 = scmp.ne.s32.totalorder %s83, %s84
      %p96 = scmp.eq.s32.totalorder %s18, 1
      %p97 = por %p95, %p96
      %p99 = scmp.ne.s32.totalorder %s84, %s98
      %p100 = scmp.eq.s32.totalorder %s18, 0
      %p101 = por %p99, %p100
      %s102 = ssub.s32 %s19, %s31
      %s103 = ssub.s32 %s20, %s27
      %s104 = sor.u32 %s102, %s103
      %p105 = scmp.eq.s32.totalorder %s104, 0
      %s107 = sadd.s32 %s106, 1
      %s108 = scalar_select %p105, %s106, %s107
      %p111 = pneg %p105
      %p112 = scmp.eq.s32.totalorder %s12, 1
      %p113 = por %p111, %p112
      %p114 = scmp.ne.s32.totalorder %s106, %s109
      %p115 = scmp.eq.s32.totalorder %s12, 0
      %p116 = por %p114, %p115
      %p117 = scmp.ne.s32.totalorder %s106, %s109
      %p118 = scmp.eq.s32.totalorder %s17, 1
      %p119 = por %p117, %p118
      %p120 = scmp.ne.s32.totalorder %s109, %s110
      %p121 = scmp.eq.s32.totalorder %s17, 0
      %p122 = por %p120, %p121
      %p123 = scmp.ne.s32.totalorder %s109, %s110
      %p124 = scmp.eq.s32.totalorder %s18, 1
      %p125 = por %p123, %p124
      %p127 = scmp.ne.s32.totalorder %s110, %s126
      %p128 = scmp.eq.s32.totalorder %s18, 0
      %p129 = por %p127, %p128
      %p130 = scmp.le.s32.totalorder 1, %s12
      %p131 = scmp.lt.s32.totalorder %s12, 3
      %p132 = pnand %p130, %p131
      %p133 = pneg %p132
      // Predicated region
      $region9: #{patch_embed_1d.1} parent=5 // pred_check
        _
      $region10: #{patch_embed_1d.1} parent=5 // pred_check_branch
        %135 = sbr.rel (%p132) target = $region12
      $region11: #{patch_embed_1d.1} parent=5 // pred_region
        %s136 = ssub.s32 %s12, 1
        // Predicated region
        $region13: #{patch_embed_1d.1} parent=11 // pred_check
          %p137 = pneg %p73
        $region14: #{patch_embed_1d.1} parent=11 // pred_check_branch
          %139 = sbr.rel (%p137) target = $region16
        $region15: #{patch_embed_1d.1} parent=11 // pred_region
          _
        $region16: #{patch_embed_1d.1} parent=11 // pred_fallthru
          _
        // Predicated region
        $region17: #{patch_embed_1d.1} parent=11 // pred_check
          %p140 = pneg %p94
        $region18: #{patch_embed_1d.1} parent=11 // pred_check_branch
          %142 = sbr.rel (%p140) target = $region20
        $region19: #{patch_embed_1d.1} parent=11 // pred_region
          _
        $region20: #{patch_embed_1d.1} parent=11 // pred_fallthru
          _
      $region12: #{patch_embed_1d.1} parent=5 // pred_fallthru
        _
      %p143 = scmp.lt.s32.totalorder %s12, 2
      // Predicated region
      $region21: #{patch_embed_1d.1} parent=5 // pred_check
        %p144 = pneg %p143
      $region22: #{patch_embed_1d.1} parent=5 // pred_check_branch
        %146 = sbr.rel (%p144) target = $region24
      $region23: #{patch_embed_1d.1} parent=5 // pred_region
        // Predicated region
        $region25: #{patch_embed_1d.1} parent=23 // pred_check
          %p147 = pneg %p46
        $region26: #{patch_embed_1d.1} parent=23 // pred_check_branch
          %149 = sbr.rel (%p147) target = $region28
        $region27: #{patch_embed_1d.1} parent=23 // pred_region
          %p150 = scmp.lt.s32.totalorder %s19, 1
          %s151 = scalar_select %p150, %s19, 1
          %p152 = scmp.lt.s32.totalorder %s20, 0
          %s153 = scalar_select %p152, %s20, 0
          %s154 = smul.addr %s151, 4
          %s155 = sadd.s32 %s153, %s154
          %s156 = smul.addr %s155, 8
          %s157 = scalar_lea.vmem %s0, %s156
        $region28: #{patch_embed_1d.1} parent=23 // pred_fallthru
          _
      $region24: #{patch_embed_1d.1} parent=5 // pred_fallthru
        _
      %p158 = scmp.le.s32.totalorder 1, %s12
      %p159 = scmp.lt.s32.totalorder %s12, 3
      %p160 = pnand %p158, %p159
      %p161 = pneg %p160
      // Predicated region
      $region29: #{patch_embed_1d.1} parent=5 // pred_check
        _
      $region30: #{patch_embed_1d.1} parent=5 // pred_check_branch
        %163 = sbr.rel (%p160) target = $region32
      $region31: #{patch_embed_1d.1} parent=5 // pred_region
        %s164 = ssub.s32 %s12, 1
        %p165 = scmp.lt.s32.totalorder %s21, 1
        %s166 = scalar_select %p165, %s21, 1
        %p167 = scmp.lt.s32.totalorder %s22, 0
        %s168 = scalar_select %p167, %s22, 0
        %s169 = smul.addr %s166, 4
        %s170 = sadd.s32 %s168, %s169
        %s171 = smul.addr %s170, 8
        %s172 = scalar_lea.vmem %s0, %s171
        %p173 = pneg %p52
        %p174 = pneg %p49
        %p175 = pneg %p73
        %p176 = pneg %p70
        %p177 = pneg %p94
        %p178 = pneg %p91
        %p179 = pneg %p122
        %p180 = pneg %p119
        %s181 = sand.u32 %s109, 1
        %s182 = scalar_lea.sflag [#allocation3], %s181
        %s183 = sand.u32 %s109, 1
        %s184 = smul.addr %s183, 8
        %s185 = scalar_lea.vmem [#allocation2], %s184
        %p186 = scmp.lt.s32.totalorder %s21, 1
        %s187 = scalar_select %p186, %s21, 1
        %p188 = scmp.lt.s32.totalorder %s22, 0
        %s189 = scalar_select %p188, %s22, 0
        %s190 = smul.addr %s187, 4
        %s191 = sadd.s32 %s189, %s190
        %s192 = smul.addr %s191, 8
        %s193 = scalar_lea.vmem %s0, %s192
        %v194 = vld [vmem:[%s193] sm:$0xff]
        %v195 = vld [vmem:[%s1] sm:$0xff]
        %v196 = vld [vmem:[%s1 + $0x8] sm:$0xff]
        %s197 = scalar_lea.vmem %s193, 8
        %v198 = vld [vmem:[%s197] sm:$0xff]
        %s199 = scalar_lea.vmem %s1, 16
        %v200 = vld [vmem:[%s199] sm:$0xff]
        %v201 = vld [vmem:[%s199 + $0x8] sm:$0xff]
        %vm202 = vcmask 130048
        %v204 = vsel %vm202, %v198, 0
        %206 = vmatprep.subr.mxu0 0.0
        %207 = vmatpush1.msra.mxu0 %v200
        %208 = vmatprep.subr.mxu0 0.0
        %209 = vmatpush1.msra.mxu0 %v201
        %210 = vmatprep.subr.mxu0 0.0
        %211 = vmatpush1.msra.mxu0 0.0
        %212 = vmatprep.subr.mxu0 0.0
        %213 = vmatpush1.msra.mxu0 0.0
        %214 = vmatprep.subr.mxu0 0.0
        %215 = vmatpush1.msra.mxu0 0.0
        %216 = vmatprep.subr.mxu0 0.0
        %217 = vmatpush1.msra.mxu0 0.0
        %218 = vmatprep.subr.mxu0 0.0
        %219 = vmatpush1.msra.mxu0 0.0
        %220 = vmatprep.subr.mxu0 0.0
        %221 = vmatpush1.msra.mxu0 0.0
        %222 = vmatprep.subr.mxu0 0.0
        %223 = vmatpush1.msra.mxu0 0.0
        %224 = vmatprep.subr.mxu0 0.0
        %225 = vmatpush1.msra.mxu0 0.0
        %226 = vmatprep.subr.mxu0 0.0
        %227 = vmatpush1.msra.mxu0 0.0
        %228 = vmatprep.subr.mxu0 0.0
        %229 = vmatpush1.msra.mxu0 0.0
        %230 = vmatprep.subr.mxu0 0.0
        %231 = vmatpush1.msra.mxu0 0.0
        %232 = vmatprep.subr.mxu0 0.0
        %233 = vmatpush1.msra.mxu0 0.0
        %234 = vmatprep.subr.mxu0 0.0
        %235 = vmatpush1.msra.mxu0 0.0
        %236 = vmatprep.subr.mxu0 0.0
        %237 = vmatpush1.msra.mxu0 0.0
        %238 = vmatprep.subr.mxu0 0.0
        %239 = vmatpush1.msra.mxu0 0.0
        %240 = vmatprep.subr.mxu0 0.0
        %241 = vmatpush1.msra.mxu0 0.0
        %242 = vmatprep.subr.mxu0 0.0
        %243 = vmatpush1.msra.mxu0 0.0
        %244 = vmatprep.subr.mxu0 0.0
        %245 = vmatpush1.msra.mxu0 0.0
        %246 = vmatprep.subr.mxu0 0.0
        %247 = vmatpush1.msra.mxu0 0.0
        %248 = vmatprep.subr.mxu0 0.0
        %249 = vmatpush1.msra.mxu0 0.0
        %250 = vmatprep.subr.mxu0 0.0
        %251 = vmatpush1.msra.mxu0 0.0
        %252 = vmatprep.subr.mxu0 0.0
        %253 = vmatpush1.msra.mxu0 0.0
        %254 = vmatprep.subr.mxu0 0.0
        %255 = vmatpush1.msra.mxu0 0.0
        %256 = vmatprep.subr.mxu0 0.0
        %257 = vmatpush1.msra.mxu0 0.0
        %258 = vmatprep.subr.mxu0 0.0
        %259 = vmatpush1.msra.mxu0 0.0
        %260 = vmatprep.subr.mxu0 0.0
        %261 = vmatpush1.msra.mxu0 0.0
        %262 = vmatprep.subr.mxu0 0.0
        %263 = vmatpush1.msra.mxu0 0.0
        %264 = vmatprep.subr.mxu0 0.0
        %265 = vmatpush1.msra.mxu0 0.0
        %266 = vmatprep.subr.mxu0 0.0
        %267 = vmatpush1.msra.mxu0 0.0
        %268 = vmatprep.subr.mxu0 0.0
        %269 = vmatpush1.msra.mxu0 0.0
        %270 = vmatprep.mubr.f32.mxu0 0.0
        %271 = vmatmul.mubr.f32.gmra.mrb[0].mxu0 %v204
        %v272 = vpop.f32.mrb[0].mxu0
        %v273 = vadd.f32 0.0, %v272
        %v274 = vpop.f32.mrb[0].mxu0
        %275 = vdwg.mxu0
        %v277 = vsel %vm202, %v194, 0
        %279 = vmatprep.subr.mxu0 0.0
        %280 = vmatpush1.msra.mxu0 %v195
        %281 = vmatprep.subr.mxu0 0.0
        %282 = vmatpush1.msra.mxu0 %v196
        %283 = vmatprep.subr.mxu0 0.0
        %284 = vmatpush1.msra.mxu0 0.0
        %285 = vmatprep.subr.mxu0 0.0
        %286 = vmatpush1.msra.mxu0 0.0
        %287 = vmatprep.subr.mxu0 0.0
        %288 = vmatpush1.msra.mxu0 0.0
        %289 = vmatprep.subr.mxu0 0.0
        %290 = vmatpush1.msra.mxu0 0.0
        %291 = vmatprep.subr.mxu0 0.0
        %292 = vmatpush1.msra.mxu0 0.0
        %293 = vmatprep.subr.mxu0 0.0
        %294 = vmatpush1.msra.mxu0 0.0
        %295 = vmatprep.subr.mxu0 0.0
        %296 = vmatpush1.msra.mxu0 0.0
        %297 = vmatprep.subr.mxu0 0.0
        %298 = vmatpush1.msra.mxu0 0.0
        %299 = vmatprep.subr.mxu0 0.0
        %300 = vmatpush1.msra.mxu0 0.0
        %301 = vmatprep.subr.mxu0 0.0
        %302 = vmatpush1.msra.mxu0 0.0
        %303 = vmatprep.subr.mxu0 0.0
        %304 = vmatpush1.msra.mxu0 0.0
        %305 = vmatprep.subr.mxu0 0.0
        %306 = vmatpush1.msra.mxu0 0.0
        %307 = vmatprep.subr.mxu0 0.0
        %308 = vmatpush1.msra.mxu0 0.0
        %309 = vmatprep.subr.mxu0 0.0
        %310 = vmatpush1.msra.mxu0 0.0
        %311 = vmatprep.subr.mxu0 0.0
        %312 = vmatpush1.msra.mxu0 0.0
        %313 = vmatprep.subr.mxu0 0.0
        %314 = vmatpush1.msra.mxu0 0.0
        %315 = vmatprep.subr.mxu0 0.0
        %316 = vmatpush1.msra.mxu0 0.0
        %317 = vmatprep.subr.mxu0 0.0
        %318 = vmatpush1.msra.mxu0 0.0
        %319 = vmatprep.subr.mxu0 0.0
        %320 = vmatpush1.msra.mxu0 0.0
        %321 = vmatprep.subr.mxu0 0.0
        %322 = vmatpush1.msra.mxu0 0.0
        %323 = vmatprep.subr.mxu0 0.0
        %324 = vmatpush1.msra.mxu0 0.0
        %325 = vmatprep.subr.mxu0 0.0
        %326 = vmatpush1.msra.mxu0 0.0
        %327 = vmatprep.subr.mxu0 0.0
        %328 = vmatpush1.msra.mxu0 0.0
        %329 = vmatprep.subr.mxu0 0.0
        %330 = vmatpush1.msra.mxu0 0.0
        %331 = vmatprep.subr.mxu0 0.0
        %332 = vmatpush1.msra.mxu0 0.0
        %333 = vmatprep.subr.mxu0 0.0
        %334 = vmatpush1.msra.mxu0 0.0
        %335 = vmatprep.subr.mxu0 0.0
        %336 = vmatpush1.msra.mxu0 0.0
        %337 = vmatprep.subr.mxu0 0.0
        %338 = vmatpush1.msra.mxu0 0.0
        %339 = vmatprep.subr.mxu0 0.0
        %340 = vmatpush1.msra.mxu0 0.0
        %341 = vmatprep.subr.mxu0 0.0
        %342 = vmatpush1.msra.mxu0 0.0
        %343 = vmatprep.mubr.f32.mxu0 0.0
        %344 = vmatmul.mubr.f32.gmra.mrb[0].mxu0 %v277
        %v345 = vpop.f32.mrb[0].mxu0
        %v346 = vadd.f32 %v273, %v345
        %v347 = vpop.f32.mrb[0].mxu0
        %348 = vdwg.mxu0
        %s349 = scalar_lea.vmem %s193, 16
        %v350 = vld [vmem:[%s349] sm:$0xff]
        %s351 = scalar_lea.vmem %s1, 32
        %v352 = vld [vmem:[%s351] sm:$0xff]
        %v353 = vld [vmem:[%s351 + $0x8] sm:$0xff]
        %v355 = vsel %vm202, %v350, 0
        %357 = vmatprep.subr.mxu0 0.0
        %358 = vmatpush1.msra.mxu0 %v352
        %359 = vmatprep.subr.mxu0 0.0
        %360 = vmatpush1.msra.mxu0 %v353
        %361 = vmatprep.subr.mxu0 0.0
        %362 = vmatpush1.msra.mxu0 0.0
        %363 = vmatprep.subr.mxu0 0.0
        %364 = vmatpush1.msra.mxu0 0.0
        %365 = vmatprep.subr.mxu0 0.0
        %366 = vmatpush1.msra.mxu0 0.0
        %367 = vmatprep.subr.mxu0 0.0
        %368 = vmatpush1.msra.mxu0 0.0
        %369 = vmatprep.subr.mxu0 0.0
        %370 = vmatpush1.msra.mxu0 0.0
        %371 = vmatprep.subr.mxu0 0.0
        %372 = vmatpush1.msra.mxu0 0.0
        %373 = vmatprep.subr.mxu0 0.0
        %374 = vmatpush1.msra.mxu0 0.0
        %375 = vmatprep.subr.mxu0 0.0
        %376 = vmatpush1.msra.mxu0 0.0
        %377 = vmatprep.subr.mxu0 0.0
        %378 = vmatpush1.msra.mxu0 0.0
        %379 = vmatprep.subr.mxu0 0.0
        %380 = vmatpush1.msra.mxu0 0.0
        %381 = vmatprep.subr.mxu0 0.0
        %382 = vmatpush1.msra.mxu0 0.0
        %383 = vmatprep.subr.mxu0 0.0
        %384 = vmatpush1.msra.mxu0 0.0
        %385 = vmatprep.subr.mxu0 0.0
        %386 = vmatpush1.msra.mxu0 0.0
        %387 = vmatprep.subr.mxu0 0.0
        %388 = vmatpush1.msra.mxu0 0.0
        %389 = vmatprep.subr.mxu0 0.0
        %390 = vmatpush1.msra.mxu0 0.0
        %391 = vmatprep.subr.mxu0 0.0
        %392 = vmatpush1.msra.mxu0 0.0
        %393 = vmatprep.subr.mxu0 0.0
        %394 = vmatpush1.msra.mxu0 0.0
        %395 = vmatprep.subr.mxu0 0.0
        %396 = vmatpush1.msra.mxu0 0.0
        %397 = vmatprep.subr.mxu0 0.0
        %398 = vmatpush1.msra.mxu0 0.0
        %399 = vmatprep.subr.mxu0 0.0
        %400 = vmatpush1.msra.mxu0 0.0
        %401 = vmatprep.subr.mxu0 0.0
        %402 = vmatpush1.msra.mxu0 0.0
        %403 = vmatprep.subr.mxu0 0.0
        %404 = vmatpush1.msra.mxu0 0.0
        %405 = vmatprep.subr.mxu0 0.0
        %406 = vmatpush1.msra.mxu0 0.0
        %407 = vmatprep.subr.mxu0 0.0
        %408 = vmatpush1.msra.mxu0 0.0
        %409 = vmatprep.subr.mxu0 0.0
        %410 = vmatpush1.msra.mxu0 0.0
        %411 = vmatprep.subr.mxu0 0.0
        %412 = vmatpush1.msra.mxu0 0.0
        %413 = vmatprep.subr.mxu0 0.0
        %414 = vmatpush1.msra.mxu0 0.0
        %415 = vmatprep.subr.mxu0 0.0
        %416 = vmatpush1.msra.mxu0 0.0
        %417 = vmatprep.subr.mxu0 0.0
        %418 = vmatpush1.msra.mxu0 0.0
        %419 = vmatprep.subr.mxu0 0.0
        %420 = vmatpush1.msra.mxu0 0.0
        %421 = vmatprep.mubr.f32.mxu0 0.0
        %422 = vmatmul.mubr.f32.gmra.mrb[0].mxu0 %v355
        %v423 = vpop.f32.mrb[0].mxu0
        %v424 = vadd.f32 0.0, %v423
        %v425 = vpop.f32.mrb[0].mxu0
        %426 = vdwg.mxu0
        %v427 = vadd.f32 %v346, %v424
        %s428 = scalar_lea.vmem %s193, 24
        %v429 = vld [vmem:[%s428] sm:$0xff]
        %s430 = scalar_lea.vmem %s1, 48
        %v431 = vld [vmem:[%s430] sm:$0xff]
        %v432 = vld [vmem:[%s430 + $0x8] sm:$0xff]
        %v434 = vsel %vm202, %v429, 0
        %436 = vmatprep.subr.mxu0 0.0
        %437 = vmatpush1.msra.mxu0 %v431
        %438 = vmatprep.subr.mxu0 0.0
        %439 = vmatpush1.msra.mxu0 %v432
        %440 = vmatprep.subr.mxu0 0.0
        %441 = vmatpush1.msra.mxu0 0.0
        %442 = vmatprep.subr.mxu0 0.0
        %443 = vmatpush1.msra.mxu0 0.0
        %444 = vmatprep.subr.mxu0 0.0
        %445 = vmatpush1.msra.mxu0 0.0
        %446 = vmatprep.subr.mxu0 0.0
        %447 = vmatpush1.msra.mxu0 0.0
        %448 = vmatprep.subr.mxu0 0.0
        %449 = vmatpush1.msra.mxu0 0.0
        %450 = vmatprep.subr.mxu0 0.0
        %451 = vmatpush1.msra.mxu0 0.0
        %452 = vmatprep.subr.mxu0 0.0
        %453 = vmatpush1.msra.mxu0 0.0
        %454 = vmatprep.subr.mxu0 0.0
        %455 = vmatpush1.msra.mxu0 0.0
        %456 = vmatprep.subr.mxu0 0.0
        %457 = vmatpush1.msra.mxu0 0.0
        %458 = vmatprep.subr.mxu0 0.0
        %459 = vmatpush1.msra.mxu0 0.0
        %460 = vmatprep.subr.mxu0 0.0
        %461 = vmatpush1.msra.mxu0 0.0
        %462 = vmatprep.subr.mxu0 0.0
        %463 = vmatpush1.msra.mxu0 0.0
        %464 = vmatprep.subr.mxu0 0.0
        %465 = vmatpush1.msra.mxu0 0.0
        %466 = vmatprep.subr.mxu0 0.0
        %467 = vmatpush1.msra.mxu0 0.0
        %468 = vmatprep.subr.mxu0 0.0
        %469 = vmatpush1.msra.mxu0 0.0
        %470 = vmatprep.subr.mxu0 0.0
        %471 = vmatpush1.msra.mxu0 0.0
        %472 = vmatprep.subr.mxu0 0.0
        %473 = vmatpush1.msra.mxu0 0.0
        %474 = vmatprep.subr.mxu0 0.0
        %475 = vmatpush1.msra.mxu0 0.0
        %476 = vmatprep.subr.mxu0 0.0
        %477 = vmatpush1.msra.mxu0 0.0
        %478 = vmatprep.subr.mxu0 0.0
        %479 = vmatpush1.msra.mxu0 0.0
        %480 = vmatprep.subr.mxu0 0.0
        %481 = vmatpush1.msra.mxu0 0.0
        %482 = vmatprep.subr.mxu0 0.0
        %483 = vmatpush1.msra.mxu0 0.0
        %484 = vmatprep.subr.mxu0 0.0
        %485 = vmatpush1.msra.mxu0 0.0
        %486 = vmatprep.subr.mxu0 0.0
        %487 = vmatpush1.msra.mxu0 0.0
        %488 = vmatprep.subr.mxu0 0.0
        %489 = vmatpush1.msra.mxu0 0.0
        %490 = vmatprep.subr.mxu0 0.0
        %491 = vmatpush1.msra.mxu0 0.0
        %492 = vmatprep.subr.mxu0 0.0
        %493 = vmatpush1.msra.mxu0 0.0
        %494 = vmatprep.subr.mxu0 0.0
        %495 = vmatpush1.msra.mxu0 0.0
        %496 = vmatprep.subr.mxu0 0.0
        %497 = vmatpush1.msra.mxu0 0.0
        %498 = vmatprep.subr.mxu0 0.0
        %499 = vmatpush1.msra.mxu0 0.0
        %500 = vmatprep.mubr.f32.mxu0 0.0
        %501 = vmatmul.mubr.f32.gmra.mrb[0].mxu0 %v434
        %v502 = vpop.f32.mrb[0].mxu0
        %v503 = vadd.f32 0.0, %v502
        %v504 = vpop.f32.mrb[0].mxu0
        %505 = vdwg.mxu0
        %v506 = vadd.f32 %v427, %v503
        %v507 = vld [vmem:[%s2] sm:$0x1]
        %v509 = vlaneseq
        %v510 = vshrl.u32 %v509, 7
        %v511 = vsub.s32 0, %v510
        %v512 = vrot.slane %v507, %v511
        %v514 = vadd.f32 %v506, %v512
        %515 = vst [vmem:[%s185] sm:$0xff] %v514
        %s516 = sand.u32 %s109, 1
        %s517 = scalar_lea.sflag [#allocation3], %s516
        %s518 = sand.u32 %s109, 1
        %s519 = smul.addr %s518, 8
        %s520 = scalar_lea.vmem [#allocation2], %s519
        // Predicated region
        $region33: #{patch_embed_1d.1} parent=31 // pred_check
          %p521 = pneg %p119
        $region34: #{patch_embed_1d.1} parent=31 // pred_check_branch
          %523 = sbr.rel (%p521) target = $region36
        $region35: #{patch_embed_1d.1} parent=31 // pred_region
          %s525 = ssub.s32 128, 128
          %526 = vsyncadd %s517, %s525
          %s527 = sadd.s32 %s22, %s21
          %s528 = smul.addr %s527, 128
          %s529 = scalar_lea.hbm %s3, %s528
          %s531 = sshll.u32 %s520, 4
          %s532 = int_to_ptr.vmem [resolvable:$true] %s531
          %534 = dma.vmem_to_hbm [thread:$0]  %s532, 128, %s529, %s517
        $region36: #{patch_embed_1d.1} parent=31 // pred_fallthru
          _
      $region32: #{patch_embed_1d.1} parent=5 // pred_fallthru
        _
      %p535 = scmp.le.s32.totalorder 2, %s12
      // Predicated region
      $region37: #{patch_embed_1d.1} parent=5 // pred_check
        %p536 = pneg %p535
      $region38: #{patch_embed_1d.1} parent=5 // pred_check_branch
        %538 = sbr.rel (%p536) target = $region40
      $region39: #{patch_embed_1d.1} parent=5 // pred_region
        %s539 = ssub.s32 %s12, 2
        // Predicated region
        $region41: #{patch_embed_1d.1} parent=39 // pred_check
          %p540 = pneg %p125
        $region42: #{patch_embed_1d.1} parent=39 // pred_check_branch
          %542 = sbr.rel (%p540) target = $region44
        $region43: #{patch_embed_1d.1} parent=39 // pred_region
          %s543 = sand.u32 %s110, 1
          %s544 = scalar_lea.sflag [#allocation3], %s543
          %s545 = sand.u32 %s110, 1
          %s546 = smul.addr %s545, 8
          %s547 = scalar_lea.vmem [#allocation2], %s546
          %548 = dma.done %s544, 128
        $region44: #{patch_embed_1d.1} parent=39 // pred_fallthru
          _
      $region40: #{patch_embed_1d.1} parent=5 // pred_fallthru
        _
    $region6: #{patch_embed_1d.1} parent=1 // loop_footer
      %s16 = sadd.s32 1, %s12
    $region7: #{patch_embed_1d.1} parent=1 // loop_footer_branch
      %11 = sbr.rel target = $region3
    $region8: #{patch_embed_1d.1} parent=1 // loop_exit
      _
    %549 = vsyncpa [#allocation3], 1
    %s550 = scalar_lea.sflag [#allocation3], 1
    %551 = vsyncpa %s550, 1

</llo_original>
